<compile_context>
chip_gen: v6e
topology: v6e:2x2x1
jax: 0.10.0
libtpu: 0.0.40
codegen_flags: <defaults>
</compile_context>

<pallas_src>
import functools

import jax
import jax.numpy as jnp
from jax import lax
from jax.experimental import pallas as pl
from jax.experimental.pallas import tpu as pltpu


# ----------------------------------------------------------------------------
# Pallas kernel: fused linear-generator + per-tile L1 partial sum
# ----------------------------------------------------------------------------
def _evaluator_kernel(feat_ref, w_ref, tgt_ref, out_ref, *,
                      n_rows, tm, needs_mask):
    i = pl.program_id(0)

    # Generator hot path: (tm, F+1) @ (F+1, D) bf16 on the MXU, f32 result.
    # Bias is folded into W via the appended ones column of the features.
    pred = jnp.dot(feat_ref[...], w_ref[...],
                   preferred_element_type=jnp.float32)

    # L1 for this row tile; target streamed as bf16, math in f32.
    diff = jnp.abs(pred - tgt_ref[...].astype(jnp.float32))

    def _write(d):
        # One lane-dense (8,128) store per step; wrapper reads [i, 0, 0].
        out_ref[...] = jnp.broadcast_to(jnp.sum(d), out_ref.shape)

    if needs_mask:
        last = pl.num_programs(0) - 1

        @pl.when(i != last)
        def _():
            _write(diff)

        @pl.when(i == last)
        def _():
            # Tail masking only on the final (ragged) tile: padded rows of the
            # last features/target block contain arbitrary data; the select
            # zeroes their contribution (even if the masked diff is NaN/Inf).
            row = i * tm + lax.broadcasted_iota(jnp.int32, (tm, 1), 0)
            _write(jnp.where(row < n_rows, diff, 0.0))
    else:
        _write(diff)


def _round_up(x, m):
    return ((x + m - 1) // m) * m


def l1_generator_eval(features, w, b, target_spec, *, tm=1024):
    """value = mean(|features @ w + b - target_spec|), computed in Pallas."""
    n_rows, feat_dim = features.shape
    spec_dim = w.shape[1]

    # Fold the bias into the matmul: ones column on features, b row on W.
    ones = jnp.ones((n_rows, 1), dtype=features.dtype)
    feat_aug = jnp.concatenate([features, ones], axis=-1).astype(jnp.bfloat16)
    w_aug = jnp.concatenate(
        [w, jnp.reshape(b, (1, spec_dim))], axis=0).astype(jnp.bfloat16)
    # bf16 on the target stream halves the dominant HBM traffic; the diff and
    # reduction stay f32 inside the kernel.
    tgt = target_spec.astype(jnp.bfloat16)

    # Large row tile (amortizes per-step overhead), clamped to the data size;
    # multiple of 16 so bf16 rows pack cleanly along sublanes.
    tm = max(16, min(tm, _round_up(n_rows, 16)))
    assert tm % 16 == 0
    num_tiles = pl.cdiv(n_rows, tm)
    needs_mask = (n_rows % tm) != 0          # static Python bool
    inv_n = 1.0 / float(n_rows * spec_dim)   # static Python scalar

    kernel = functools.partial(_evaluator_kernel, n_rows=n_rows, tm=tm,
                               needs_mask=needs_mask)

    partials = pl.pallas_call(
        kernel,
        # One independent (8,128) slab per tile -> full unmasked stores and a
        # grid axis that can be legally sharded across TensorCores.
        out_shape=jax.ShapeDtypeStruct((num_tiles, 8, 128), jnp.float32),
        grid_spec=pltpu.PrefetchScalarGridSpec(
            num_scalar_prefetch=0,
            grid=(num_tiles,),
            in_specs=[
                pl.BlockSpec((tm, feat_dim + 1), lambda i: (i, 0)),        # features(+1)
                pl.BlockSpec((feat_dim + 1, spec_dim), lambda i: (0, 0)),  # W (resident)
                pl.BlockSpec((tm, spec_dim), lambda i: (i, 0)),            # target tile
            ],
            out_specs=pl.BlockSpec((1, 8, 128), lambda i: (i, 0, 0)),
        ),
        compiler_params=pltpu.CompilerParams(
            dimension_semantics=("parallel",),
            vmem_limit_bytes=32 * 1024 * 1024),
    )(feat_aug, w_aug, tgt)

    # Final reduction over per-tile partials + mean scale in the wrapper.
    return jnp.sum(partials[:, 0, 0]) * inv_n


# ----------------------------------------------------------------------------
# Glue: synthetic generator feature construction + Evaluator.forward
# ----------------------------------------------------------------------------
def _build_features(f0_list, phoneme_list, speaker_id, n_phoneme, speaker_emb):
    """Concatenate per-item feature matrices (time-major), mirroring the list
    handling of the original forward."""
    feats = []
    for item_idx in range(len(f0_list)):
        f0 = f0_list[item_idx]                      # (T, 1) float32
        ph = phoneme_list[item_idx]                 # (T,)   int32
        ph_oh = jax.nn.one_hot(ph, n_phoneme, dtype=jnp.float32)   # (T, P)
        spk = speaker_emb[speaker_id[item_idx]]     # (S,)
        spk = jnp.broadcast_to(spk[None, :], (f0.shape[0], spk.shape[0]))
        feats.append(jnp.concatenate([f0, ph_oh, spk], axis=-1))
    return jnp.concatenate(feats, axis=0)           # (sum(T_i), F)


def evaluator_forward(data, params, *, tm=1024):
    """JAX/Pallas equivalent of Evaluator.forward."""
    speaker_id = (jnp.stack(data["speaker_id"])
                  if data["speaker_id"] is not None else None)
    features = _build_features(
        data["f0"], data["phoneme"], speaker_id,
        n_phoneme=params["n_phoneme"], speaker_emb=params["speaker_emb"])
    target_spec = jnp.concatenate(list(data["spec"]), axis=0)   # (sum(T_i), D)
    value = l1_generator_eval(features, params["w"], params["b"],
                              target_spec, tm=tm)
    # Matches `len(data)` on the TypedDict / dict (number of fields), exactly
    # as in the original forward.
    return {"value": value, "data_num": len(data)}


# ----------------------------------------------------------------------------
# Main
# ----------------------------------------------------------------------------
if __name__ == "__main__":
    B, T = 2, 100         # 2 items, 100 frames each -> N = 200 rows
    N_PHONEME = 40
    SPK_EMB = 4
    N_SPEAKER = 8
    SPEC_DIM = 64
    FEAT_DIM = 1 + N_PHONEME + SPK_EMB   # f0 + phoneme one-hot + speaker emb

    key = jax.random.PRNGKey(0)
    k_f0, k_ph, k_spk, k_spec, k_w, k_emb = jax.random.split(key, 6)

    # Deterministic synthetic "dataset" (lists of per-item tensors, as in torch)
    f0_all = jax.random.normal(k_f0, (B, T, 1), dtype=jnp.float32)
    ph_all = jax.random.randint(k_ph, (B, T), 0, N_PHONEME, dtype=jnp.int32)
    spk_all = jax.random.randint(k_spk, (B,), 0, N_SPEAKER, dtype=jnp.int32)
    spec_all = jax.random.normal(k_spec, (B, T, SPEC_DIM), dtype=jnp.float32)

    data = {
        "f0": [f0_all[i] for i in range(B)],
        "phoneme": [ph_all[i] for i in range(B)],
        "spec": [spec_all[i] for i in range(B)],
        "speaker_id": [spk_all[i] for i in range(B)],
    }

    # Deterministic synthetic generator parameters
    params = {
        "w": (jax.random.normal(k_w, (FEAT_DIM, SPEC_DIM), dtype=jnp.float32)
              * (1.0 / jnp.sqrt(FEAT_DIM))),
        "b": jnp.zeros((1, SPEC_DIM), dtype=jnp.float32),
        "speaker_emb": jax.random.normal(k_emb, (N_SPEAKER, SPK_EMB),
                                         dtype=jnp.float32),
        "n_phoneme": N_PHONEME,
    }

    # tm=128 here so the small demo exercises the cdiv-grid tail masking
    # (N=200 rows -> 2 tiles, last tile partially masked).  Default tm=1024
    # is the production setting for large N.
    out = evaluator_forward(data, params, tm=128)
    value = jax.block_until_ready(out["value"])

    # Pure-JAX reference (same bf16 operand/target rounding, f32 math)
    spk_ids = jnp.stack(data["speaker_id"])
    feats_ref = _build_features(data["f0"], data["phoneme"], spk_ids,
                                N_PHONEME, params["speaker_emb"])
    tgt_ref = jnp.concatenate(list(data["spec"]), axis=0)
    n_ref = feats_ref.shape[0]
    feats_aug = jnp.concatenate(
        [feats_ref, jnp.ones((n_ref, 1), jnp.float32)], axis=-1)
    feats_bf = feats_aug.astype(jnp.bfloat16).astype(jnp.float32)
    w_aug = jnp.concatenate([params["w"], params["b"]], axis=0)
    w_bf = w_aug.astype(jnp.bfloat16).astype(jnp.float32)
    tgt_bf = tgt_ref.astype(jnp.bfloat16).astype(jnp.float32)
    ref_value = jnp.mean(jnp.abs(feats_bf @ w_bf - tgt_bf))
    assert jnp.allclose(value, ref_value, rtol=1e-3, atol=1e-4), (value, ref_value)
    assert out["data_num"] == len(data)

    print("KERNEL_OK")
</pallas_src>

<mosaic_0001>
module attributes {stable_mosaic.version = 11 : i64} {
  func.func @_evaluator_kernel(%arg0: i32, %arg1: memref<128x46xbf16, #tpu.memory_space<vmem>>, %arg2: memref<46x64xbf16, #tpu.memory_space<vmem>>, %arg3: memref<128x64xbf16, #tpu.memory_space<vmem>>, %arg4: memref<1x8x128xf32, #tpu.memory_space<vmem>>) attributes {dimension_semantics = [#tpu.dimension_semantics<parallel>], iteration_bounds = array<i64: 2>, scalar_prefetch = 0 : i64, scratch_operands = 0 : i64, tpu.core_type = #tpu.core_type<tc>, window_params = [{transform_indices = @transform_0, window_bounds = array<i64: 128, 46>}, {pipeline_mode = #tpu.pipeline_mode<synchronous>, transform_indices = @transform_1, window_bounds = array<i64: 46, 64>}, {transform_indices = @transform_2, window_bounds = array<i64: 128, 64>}, {transform_indices = @transform_3, window_bounds = array<i64: 1, 8, 128>}]} {
    %c0 = arith.constant 0 : index
    %c0_0 = arith.constant 0 : index
    %0 = vector.load %arg1[%c0, %c0_0] : memref<128x46xbf16, #tpu.memory_space<vmem>>, vector<128x46xbf16>
    %c0_1 = arith.constant 0 : index
    %c0_2 = arith.constant 0 : index
    %1 = vector.load %arg2[%c0_1, %c0_2] : memref<46x64xbf16, #tpu.memory_space<vmem>>, vector<46x64xbf16>
    %cst = arith.constant dense<0.000000e+00> : vector<128x64xf32>
    %2 = tpu.matmul %0, %1, %cst {dimension_numbers = #tpu.dot_dimension_numbers<[1], [0], [0], [1], [0, 0, 1, 1], [], []>} : vector<128x46xbf16>, vector<46x64xbf16>, vector<128x64xf32> -> vector<128x64xf32>
    %c0_3 = arith.constant 0 : index
    %c0_4 = arith.constant 0 : index
    %3 = vector.load %arg3[%c0_3, %c0_4] : memref<128x64xbf16, #tpu.memory_space<vmem>>, vector<128x64xbf16>
    %4 = arith.extf %3 : vector<128x64xbf16> to vector<128x64xf32>
    %5 = arith.subf %2, %4 : vector<128x64xf32>
    %6 = math.absf %5 : vector<128x64xf32>
    %c1_i32 = arith.constant 1 : i32
    %7 = arith.cmpi ne, %arg0, %c1_i32 : i32
    %8 = arith.extui %7 : i1 to i32
    %c0_i32 = arith.constant 0 : i32
    %9 = arith.cmpi ne, %8, %c0_i32 : i32
    scf.if %9 {
      %13 = vector.shape_cast %6 : vector<128x64xf32> to vector<1x128x64xf32>
      %cst_7 = arith.constant dense<0.000000e+00> : vector<1xf32>
      %14 = vector.multi_reduction <add>, %13, %cst_7 [1, 2] : vector<1x128x64xf32> to vector<1xf32>
      %15 = vector.shape_cast %14 : vector<1xf32> to vector<1x1x1xf32>
      %16 = vector.extract %15[0, 0, 0] : f32 from vector<1x1x1xf32>
      %17 = vector.broadcast %16 : f32 to vector<1x8x128xf32>
      %c0_8 = arith.constant 0 : index
      %c0_9 = arith.constant 0 : index
      %c0_10 = arith.constant 0 : index
      %18 = vector.load %arg4[%c0_8, %c0_9, %c0_10] : memref<1x8x128xf32, #tpu.memory_space<vmem>>, vector<1x8x128xf32>
      tpu.vector_store %arg4[%c0_8, %c0_9, %c0_10], %17 {strides = array<i32>} : memref<1x8x128xf32, #tpu.memory_space<vmem>>, vector<1x8x128xf32>,
    } else {
    }
    %c1_i32_5 = arith.constant 1 : i32
    %10 = arith.cmpi eq, %arg0, %c1_i32_5 : i32
    %11 = arith.extui %10 : i1 to i32
    %c0_i32_6 = arith.constant 0 : i32
    %12 = arith.cmpi ne, %11, %c0_i32_6 : i32
    scf.if %12 {
      %c128_i32 = arith.constant 128 : i32
      %13 = arith.muli %arg0, %c128_i32 : i32
      %14 = tpu.iota {dimensions = array<i32: 0>} : vector<128x1xi32>
      %15 = vector.broadcast %13 : i32 to vector<128x1xi32>
      %16 = arith.addi %15, %14 : vector<128x1xi32>
      %c200_i32 = arith.constant 200 : i32
      %17 = vector.broadcast %c200_i32 : i32 to vector<128x1xi32>
      %18 = arith.cmpi slt, %16, %17 : vector<128x1xi32>
      %cst_7 = arith.constant 0.000000e+00 : f32
      %19 = vector.shape_cast %18 : vector<128x1xi1> to vector<128x1xi1>
      %20 = vector.broadcast %19 : vector<128x1xi1> to vector<128x64xi1>
      %21 = vector.broadcast %cst_7 : f32 to vector<128x64xf32>
      %22 = arith.select %20, %6, %21 : vector<128x64xi1>, vector<128x64xf32>
      %23 = vector.shape_cast %22 : vector<128x64xf32> to vector<1x128x64xf32>
      %cst_8 = arith.constant dense<0.000000e+00> : vector<1xf32>
      %24 = vector.multi_reduction <add>, %23, %cst_8 [1, 2] : vector<1x128x64xf32> to vector<1xf32>
      %25 = vector.shape_cast %24 : vector<1xf32> to vector<1x1x1xf32>
      %26 = vector.extract %25[0, 0, 0] : f32 from vector<1x1x1xf32>
      %27 = vector.broadcast %26 : f32 to vector<1x8x128xf32>
      %c0_9 = arith.constant 0 : index
      %c0_10 = arith.constant 0 : index
      %c0_11 = arith.constant 0 : index
      %28 = vector.load %arg4[%c0_9, %c0_10, %c0_11] : memref<1x8x128xf32, #tpu.memory_space<vmem>>, vector<1x8x128xf32>
      tpu.vector_store %arg4[%c0_9, %c0_10, %c0_11], %27 {strides = array<i32>} : memref<1x8x128xf32, #tpu.memory_space<vmem>>, vector<1x8x128xf32>,
    } else {
    }
    return
  }
  func.func @transform_0(%arg0: i32) -> (i32, i32) {
    %c0_i32 = arith.constant 0 : i32
    %c0_i32_0 = arith.constant 0 : i32
    return %arg0, %c0_i32 : i32, i32
  }
  func.func @transform_1(%arg0: i32) -> (i32, i32) {
    %c0_i32 = arith.constant 0 : i32
    %c0_i32_0 = arith.constant 0 : i32
    %c0_i32_1 = arith.constant 0 : i32
    return %c0_i32, %c0_i32_0 : i32, i32
  }
  func.func @transform_2(%arg0: i32) -> (i32, i32) {
    %c0_i32 = arith.constant 0 : i32
    %c0_i32_0 = arith.constant 0 : i32
    return %arg0, %c0_i32 : i32, i32
  }
  func.func @transform_3(%arg0: i32) -> (i32, i32, i32) {
    %c0_i32 = arith.constant 0 : i32
    %c0_i32_0 = arith.constant 0 : i32
    %c0_i32_1 = arith.constant 0 : i32
    return %arg0, %c0_i32, %c0_i32_0 : i32, i32, i32
  }
}

</mosaic_0001>

<llo_original>
// kernel: tpu_custom_call.1
$region0: #{tpu_custom_call.1}
  #allocation0 [shape = 'u32[]', space=smem, size = 0x4, offset = 0x4, fixed_abs, tag = 'smem constant byte address 0x4 - core index']
  #allocation1 [shape = 'u32[144,128]{1,0:T(1,128)}', space=vmem, size = 0x12000, scoped, tag = 'internal scratch']
  %s0 = inlined_call_operand.vmem [shape: bf16[200,46], index: 0, kind: input, shape index: {}]
  %s1 = inlined_call_operand.vmem [shape: bf16[46,64], index: 1, kind: input, shape index: {}]
  %s2 = inlined_call_operand.vmem [shape: bf16[200,64], index: 2, kind: input, shape index: {}]
  %s3 = inlined_call_operand.hbm [shape: f32[2,8,128], index: 3, kind: output, shape index: {}]
  %s4 = sld [smem:[#allocation0]]
  $region53: #{tpu_custom_call.1} parent=0
    _
  %s6 = ssub.s32 1, %s4
  %s7 = scalar_select 0, %s6, %s4
  $region1: #{tpu_custom_call.1} parent=0
    #allocation2 [shape = 'u8[8192]{0}', space=vmem, size = 0x2000, scoped, tag = 'output window, operand 0']
    #allocation3 [shape = 's32[2]{0}', space=sflag, size = 0x8, scoped, tag = 'scoped memory for tpu_custom_call.1']
    %8 = vsyncpa [#allocation3], 0
    %s9 = scalar_lea.sflag [#allocation3], 1
    %10 = vsyncpa %s9, 0
    loop: start=0, step=1, limit=4
    $region2: #{tpu_custom_call.1} parent=1 // loop_pre_header
      _
    $region3: #{tpu_custom_call.1} parent=1 // loop_header
      %s12 = sphi 0, %s16
      %p13 = scmp.ge.s32.totalorder %s12, 4
      %s22 = sphi 0, %s24
      %s25 = sphi 0, %s22
      %s26 = sphi 0, %s25
      %s42 = sphi 0, %s26
      %s46 = sphi 0, %s46
      %s48 = sphi 0, %s46
      %s49 = sphi 0, %s48
      %s63 = sphi 0, %s49
      %s69 = sphi 0, %s71
      %s72 = sphi 0, %s69
      %s73 = sphi 0, %s72
      %s89 = sphi 0, %s73
      %s95 = sphi 0, %s97
      %s98 = sphi 0, %s95
      %s99 = sphi 0, %s98
      %s115 = sphi 0, %s99
    $region4: #{tpu_custom_call.1} parent=1 // loop_header_branch
      %15 = sbr.rel (%p13) target = $region8
    $region5: #{tpu_custom_call.1} parent=1 // loop_body
      %s17 = ssub.s32 %s12, 1
      %s18 = ssub.s32 %s12, 2
      %s19 = sadd.s32 %s12, 1
      %s20 = ssub.s32 %s12, %s19
      %p21 = scmp.eq.s32.totalorder %s20, 0
      %s23 = sadd.s32 %s22, 1
      %s24 = scalar_select %p21, %s22, %s23
      %p27 = pneg %p21
      %p28 = scmp.eq.s32.totalorder %s12, 1
      %p29 = por %p27, %p28
      %p30 = scmp.ne.s32.totalorder %s22, %s25
      %p31 = scmp.eq.s32.totalorder %s12, 0
      %p32 = por %p30, %p31
      %p33 = scmp.ne.s32.totalorder %s22, %s25
      %p34 = scmp.eq.s32.totalorder %s17, 1
      %p35 = por %p33, %p34
      %p36 = scmp.ne.s32.totalorder %s25, %s26
      %p37 = scmp.eq.s32.totalorder %s17, 0
      %p38 = por %p36, %p37
      %p39 = scmp.ne.s32.totalorder %s25, %s26
      %p40 = scmp.eq.s32.totalorder %s18, 1
      %p41 = por %p39, %p40
      %p43 = scmp.ne.s32.totalorder %s26, %s42
      %p44 = scmp.eq.s32.totalorder %s18, 0
      %p45 = por %p43, %p44
      %s47 = sadd.s32 %s46, 1
      %p50 = scmp.eq.s32.totalorder %s12, 1
      %p51 = scmp.ne.s32.totalorder %s46, %s48
      %p52 = scmp.eq.s32.totalorder %s12, 0
      %p53 = por %p51, %p52
      %p54 = scmp.ne.s32.totalorder %s46, %s48
      %p55 = scmp.eq.s32.totalorder %s17, 1
      %p56 = por %p54, %p55
      %p57 = scmp.ne.s32.totalorder %s48, %s49
      %p58 = scmp.eq.s32.totalorder %s17, 0
      %p59 = por %p57, %p58
      %p60 = scmp.ne.s32.totalorder %s48, %s49
      %p61 = scmp.eq.s32.totalorder %s18, 1
      %p62 = por %p60, %p61
      %p64 = scmp.ne.s32.totalorder %s49, %s63
      %p65 = scmp.eq.s32.totalorder %s18, 0
      %p66 = por %p64, %p65
      %s67 = ssub.s32 %s12, %s19
      %p68 = scmp.eq.s32.totalorder %s67, 0
      %s70 = sadd.s32 %s69, 1
      %s71 = scalar_select %p68, %s69, %s70
      %p74 = pneg %p68
      %p75 = scmp.eq.s32.totalorder %s12, 1
      %p76 = por %p74, %p75
      %p77 = scmp.ne.s32.totalorder %s69, %s72
      %p78 = scmp.eq.s32.totalorder %s12, 0
      %p79 = por %p77, %p78
      %p80 = scmp.ne.s32.totalorder %s69, %s72
      %p81 = scmp.eq.s32.totalorder %s17, 1
      %p82 = por %p80, %p81
      %p83 = scmp.ne.s32.totalorder %s72, %s73
      %p84 = scmp.eq.s32.totalorder %s17, 0
      %p85 = por %p83, %p84
      %p86 = scmp.ne.s32.totalorder %s72, %s73
      %p87 = scmp.eq.s32.totalorder %s18, 1
      %p88 = por %p86, %p87
      %p90 = scmp.ne.s32.totalorder %s73, %s89
      %p91 = scmp.eq.s32.totalorder %s18, 0
      %p92 = por %p90, %p91
      %s93 = ssub.s32 %s12, %s19
      %p94 = scmp.eq.s32.totalorder %s93, 0
      %s96 = sadd.s32 %s95, 1
      %s97 = scalar_select %p94, %s95, %s96
      %p100 = pneg %p94
      %p101 = scmp.eq.s32.totalorder %s12, 1
      %p102 = por %p100, %p101
      %p103 = scmp.ne.s32.totalorder %s95, %s98
      %p104 = scmp.eq.s32.totalorder %s12, 0
      %p105 = por %p103, %p104
      %p106 = scmp.ne.s32.totalorder %s95, %s98
      %p107 = scmp.eq.s32.totalorder %s17, 1
      %p108 = por %p106, %p107
      %p109 = scmp.ne.s32.totalorder %s98, %s99
      %p110 = scmp.eq.s32.totalorder %s17, 0
      %p111 = por %p109, %p110
      %p112 = scmp.ne.s32.totalorder %s98, %s99
      %p113 = scmp.eq.s32.totalorder %s18, 1
      %p114 = por %p112, %p113
      %p116 = scmp.ne.s32.totalorder %s99, %s115
      %p117 = scmp.eq.s32.totalorder %s18, 0
      %p118 = por %p116, %p117
      %p119 = scmp.le.s32.totalorder 1, %s12
      %p120 = scmp.lt.s32.totalorder %s12, 3
      %p121 = pnand %p119, %p120
      %p122 = pneg %p121
      // Predicated region
      $region9: #{tpu_custom_call.1} parent=5 // pred_check
        _
      $region10: #{tpu_custom_call.1} parent=5 // pred_check_branch
        %124 = sbr.rel (%p121) target = $region12
      $region11: #{tpu_custom_call.1} parent=5 // pred_region
        %s125 = ssub.s32 %s12, 1
        // Predicated region
        $region13: #{tpu_custom_call.1} parent=11 // pred_check
          %p126 = pneg %p59
        $region14: #{tpu_custom_call.1} parent=11 // pred_check_branch
          %128 = sbr.rel (%p126) target = $region16
        $region15: #{tpu_custom_call.1} parent=11 // pred_region
          _
        $region16: #{tpu_custom_call.1} parent=11 // pred_fallthru
          _
      $region12: #{tpu_custom_call.1} parent=5 // pred_fallthru
        _
      %p129 = scmp.lt.s32.totalorder %s12, 2
      // Predicated region
      $region17: #{tpu_custom_call.1} parent=5 // pred_check
        %p130 = pneg %p129
      $region18: #{tpu_custom_call.1} parent=5 // pred_check_branch
        %132 = sbr.rel (%p130) target = $region20
      $region19: #{tpu_custom_call.1} parent=5 // pred_region
        // Predicated region
        $region21: #{tpu_custom_call.1} parent=19 // pred_check
          %p133 = pneg %p32
        $region22: #{tpu_custom_call.1} parent=19 // pred_check_branch
          %135 = sbr.rel (%p133) target = $region24
        $region23: #{tpu_custom_call.1} parent=19 // pred_region
          %s136 = smul.u32 16, %s12
          %s137 = ssub.s32 25, %s136
          %p138 = scmp.lt.s32.totalorder %s137, 16
          %s139 = scalar_select %p138, %s137, 16
          %s140 = smul.u32 64, %s139
          %p141 = scmp.lt.s32.totalorder %s136, 24
          %s142 = scalar_select %p141, %s136, 24
          %s143 = smul.addr %s142, 4
          %s144 = scalar_lea.vmem %s0, %s143
          %s145 = smul.u32 16, %s12
          %s146 = ssub.s32 25, %s145
          %p147 = scmp.lt.s32.totalorder %s146, 16
          %s148 = scalar_select %p147, %s146, 16
          %s149 = smul.u32 64, %s148
        $region24: #{tpu_custom_call.1} parent=19 // pred_fallthru
          _
        // Predicated region
        $region25: #{tpu_custom_call.1} parent=19 // pred_check
          %p150 = pneg %p79
        $region26: #{tpu_custom_call.1} parent=19 // pred_check_branch
          %152 = sbr.rel (%p150) target = $region28
        $region27: #{tpu_custom_call.1} parent=19 // pred_region
          %s153 = smul.u32 16, %s12
          %s154 = ssub.s32 25, %s153
          %p155 = scmp.lt.s32.totalorder %s154, 16
          %s156 = scalar_select %p155, %s154, 16
          %s157 = smul.u32 64, %s156
          %p158 = scmp.lt.s32.totalorder %s153, 24
          %s159 = scalar_select %p158, %s153, 24
          %s160 = smul.addr %s159, 4
          %s161 = scalar_lea.vmem %s2, %s160
          %s162 = smul.u32 16, %s12
          %s163 = ssub.s32 25, %s162
          %p164 = scmp.lt.s32.totalorder %s163, 16
          %s165 = scalar_select %p164, %s163, 16
          %s166 = smul.u32 64, %s165
        $region28: #{tpu_custom_call.1} parent=19 // pred_fallthru
          _
      $region20: #{tpu_custom_call.1} parent=5 // pred_fallthru
        _
      %p167 = scmp.le.s32.totalorder 1, %s12
      %p168 = scmp.lt.s32.totalorder %s12, 3
      %p169 = pnand %p167, %p168
      %p170 = pneg %p169
      // Predicated region
      $region29: #{tpu_custom_call.1} parent=5 // pred_check
        _
      $region30: #{tpu_custom_call.1} parent=5 // pred_check_branch
        %172 = sbr.rel (%p169) target = $region32
      $region31: #{tpu_custom_call.1} parent=5 // pred_region
        %s173 = ssub.s32 %s12, 1
        %s174 = smul.u32 16, %s17
        %s175 = ssub.s32 25, %s174
        %p176 = scmp.lt.s32.totalorder %s175, 16
        %s177 = scalar_select %p176, %s175, 16
        %s178 = smul.u32 64, %s177
        %p179 = scmp.lt.s32.totalorder %s174, 24
        %s180 = scalar_select %p179, %s174, 24
        %s181 = smul.addr %s180, 4
        %s182 = scalar_lea.vmem %s0, %s181
        %p183 = pneg %p38
        %p184 = pneg %p35
        %p185 = pneg %p59
        %p186 = pneg %p56
        %s187 = smul.u32 16, %s17
        %s188 = ssub.s32 25, %s187
        %p189 = scmp.lt.s32.totalorder %s188, 16
        %s190 = scalar_select %p189, %s188, 16
        %s191 = smul.u32 64, %s190
        %p192 = scmp.lt.s32.totalorder %s187, 24
        %s193 = scalar_select %p192, %s187, 24
        %s194 = smul.addr %s193, 4
        %s195 = scalar_lea.vmem %s2, %s194
        %p196 = pneg %p85
        %p197 = pneg %p82
        %p198 = pneg %p111
        %p199 = pneg %p108
        %s200 = sand.u32 %s98, 1
        %s201 = scalar_lea.sflag [#allocation3], %s200
        %s202 = sand.u32 %s98, 1
        %s203 = smul.addr %s202, 8
        %s204 = scalar_lea.vmem [#allocation2], %s203
        %s205 = smul.u32 16, %s17
        %s206 = ssub.s32 25, %s205
        %p207 = scmp.lt.s32.totalorder %s206, 16
        %s208 = scalar_select %p207, %s206, 16
        %s209 = smul.u32 64, %s208
        %p210 = scmp.lt.s32.totalorder %s205, 24
        %s211 = scalar_select %p210, %s205, 24
        %s212 = smul.addr %s211, 4
        %s213 = scalar_lea.vmem %s0, %s212
        %s214 = smul.u32 16, %s17
        %s215 = ssub.s32 25, %s214
        %p216 = scmp.lt.s32.totalorder %s215, 16
        %s217 = scalar_select %p216, %s215, 16
        %s218 = smul.u32 64, %s217
        %s219 = smul.u32 16, %s17
        %s220 = ssub.s32 25, %s219
        %p221 = scmp.lt.s32.totalorder %s220, 16
        %s222 = scalar_select %p221, %s220, 16
        %s223 = smul.u32 64, %s222
        %p224 = scmp.lt.s32.totalorder %s219, 24
        %s225 = scalar_select %p224, %s219, 24
        %s226 = smul.addr %s225, 4
        %s227 = scalar_lea.vmem %s2, %s226
        %s228 = smul.u32 16, %s17
        %s229 = ssub.s32 25, %s228
        %p230 = scmp.lt.s32.totalorder %s229, 16
        %s231 = scalar_select %p230, %s229, 16
        %s232 = smul.u32 64, %s231
        %v234 = vld [vmem:[%s213] sm:$0xf]
        %v235 = vld [vmem:[%s213 + $0x4] sm:$0xf]
        %v236 = vld [vmem:[%s213 + $0x8] sm:$0xf]
        %v237 = vld [vmem:[%s213 + $0xc] sm:$0xf]
        %v238 = vld [vmem:[%s213 + $0x10] sm:$0xf]
        %v239 = vld [vmem:[%s213 + $0x14] sm:$0xf]
        %v240 = vld [vmem:[%s213 + $0x18] sm:$0xf]
        %v241 = vld [vmem:[%s213 + $0x1c] sm:$0xf]
        %v242 = vld [vmem:[%s213 + $0x20] sm:$0xf]
        %v243 = vld [vmem:[%s213 + $0x24] sm:$0xf]
        %v244 = vld [vmem:[%s213 + $0x28] sm:$0xf]
        %v245 = vld [vmem:[%s213 + $0x2c] sm:$0xf]
        %v246 = vld [vmem:[%s213 + $0x30] sm:$0xf]
        %v247 = vld [vmem:[%s213 + $0x34] sm:$0xf]
        %v248 = vld [vmem:[%s213 + $0x38] sm:$0xf]
        %v249 = vld [vmem:[%s213 + $0x3c] sm:$0xf]
        %v250 = vld [vmem:[%s1] sm:$0xf]
        %v251 = vld [vmem:[%s1 + $0x4] sm:$0xf]
        %v252 = vld [vmem:[%s1 + $0x8] sm:$0xf]
        %v253 = vld [vmem:[%s1 + $0xc] sm:$0xf]
        %v254 = vld [vmem:[%s1 + $0x10] sm:$0xf]
        %v255 = vld [vmem:[%s1 + $0x14] sm:$0x7]
        %v272 = vunpack.c.l.b16 %v234
        %v273 = vunpack.c.l.b16 %v235
        %v274 = vunpack.c.l.b16 %v236
        %v275 = vunpack.c.l.b16 %v237
        %v276 = vunpack.c.l.b16 %v238
        %v277 = vunpack.c.l.b16 %v239
        %v278 = vunpack.c.l.b16 %v240
        %v279 = vunpack.c.l.b16 %v241
        %v280 = vunpack.c.l.b16 %v242
        %v281 = vunpack.c.l.b16 %v243
        %v282 = vunpack.c.l.b16 %v244
        %v283 = vunpack.c.l.b16 %v245
        %v284 = vunpack.c.l.b16 %v246
        %v285 = vunpack.c.l.b16 %v247
        %v286 = vunpack.c.l.b16 %v248
        %v287 = vunpack.c.l.b16 %v249
        %v288 = vpack.c.b16 %v273, %v272
        %v289 = vpack.c.b16 %v275, %v274
        %v290 = vpack.c.b16 %v277, %v276
        %v291 = vpack.c.b16 %v279, %v278
        %v292 = vpack.c.b16 %v281, %v280
        %v293 = vpack.c.b16 %v283, %v282
        %v294 = vpack.c.b16 %v285, %v284
        %v295 = vpack.c.b16 %v287, %v286
        %v302 = vunpack.c.l.b16 %v250
        %v303 = vunpack.c.l.b16 %v251
        %v304 = vunpack.c.l.b16 %v252
        %v305 = vunpack.c.l.b16 %v253
        %v306 = vunpack.c.l.b16 %v254
        %v307 = vunpack.c.l.b16 %v255
        %v308 = vpack.c.b16 %v303, %v302
        %v309 = vpack.c.b16 %v305, %v304
        %v310 = vpack.c.b16 %v307, %v306
        %vm313 = vcmask 375808
        %v315 = vsel %vm313, %v288, 0
        %v318 = vsel %vm313, %v289, 0
        %v321 = vsel %vm313, %v290, 0
        %v324 = vsel %vm313, %v291, 0
        %v327 = vsel %vm313, %v292, 0
        %v330 = vsel %vm313, %v293, 0
        %v333 = vsel %vm313, %v294, 0
        %v336 = vsel %vm313, %v295, 0
        %vm338 = vcmask 1046528
        %v340 = vsel %vm338, %v310, 0
        %342 = vmatprep.subr.bf16.mxu0 0
        %343 = vmatpush1.bf16.msra.mxu0 0
        %344 = vmatprep.subr.bf16.mxu0 0
        %345 = vmatpush1.bf16.msra.mxu0 0
        %346 = vmatprep.subr.bf16.mxu0 0
        %347 = vmatpush1.bf16.msra.mxu0 0
        %348 = vmatprep.subr.bf16.mxu0 0
        %349 = vmatpush1.bf16.msra.mxu0 0
        %350 = vmatprep.subr.bf16.mxu0 0
        %351 = vmatpush1.bf16.msra.mxu0 0
        %352 = vmatprep.subr.bf16.mxu0 0
        %353 = vmatpush1.bf16.msra.mxu0 %v340
        %354 = vmatprep.subr.bf16.mxu0 0
        %355 = vmatpush1.bf16.msra.mxu0 %v309
        %356 = vmatprep.subr.bf16.mxu0 0
        %357 = vmatpush1.bf16.msra.mxu0 %v308
        %358 = vmatprep.subr.bf16.mxu0 0
        %359 = vmatpush2.bf16.msra.mxu0 0
        %360 = vmatprep.subr.bf16.mxu0 0
        %361 = vmatpush2.bf16.msra.mxu0 0
        %362 = vmatprep.subr.bf16.mxu0 0
        %363 = vmatpush2.bf16.msra.mxu0 0
        %364 = vmatprep.subr.bf16.mxu0 0
        %365 = vmatpush2.bf16.msra.mxu0 0
        %366 = vmatprep.subr.bf16.mxu0 0
        %367 = vmatpush2.bf16.msra.mxu0 0
        %368 = vmatprep.subr.bf16.mxu0 0
        %369 = vmatpush2.bf16.msra.mxu0 0
        %370 = vmatprep.subr.bf16.mxu0 0
        %371 = vmatpush2.bf16.msra.mxu0 0
        %372 = vmatprep.subr.bf16.mxu0 0
        %373 = vmatpush2.bf16.msra.mxu0 0
        %374 = vmatprep.mubr.bf16.mxu0 0
        %375 = vmatmul.mubr.bf16.gmra.mxu0 %v315
        %v376 = vpop.f32.mrf.mxu0
        %v377 = vadd.f32 0.0, %v376
        %v378 = vpop.f32.mrf.mxu0
        %v379 = vpop.f32.mrf.mxu0
        %v380 = vadd.f32 0.0, %v379
        %v381 = vpop.f32.mrf.mxu0
        %382 = vmatprep.mubr.bf16.mxu0 0
        %383 = vmatmul.mubr.bf16.gmra.mxu0 %v318
        %v384 = vpop.f32.mrf.mxu0
        %v385 = vadd.f32 0.0, %v384
        %v386 = vpop.f32.mrf.mxu0
        %v387 = vpop.f32.mrf.mxu0
        %v388 = vadd.f32 0.0, %v387
        %v389 = vpop.f32.mrf.mxu0
        %390 = vmatprep.mubr.bf16.mxu0 0
        %391 = vmatmul.mubr.bf16.gmra.mxu0 %v321
        %v392 = vpop.f32.mrf.mxu0
        %v393 = vadd.f32 0.0, %v392
        %v394 = vpop.f32.mrf.mxu0
        %v395 = vpop.f32.mrf.mxu0
        %v396 = vadd.f32 0.0, %v395
        %v397 = vpop.f32.mrf.mxu0
        %398 = vmatprep.mubr.bf16.mxu0 0
        %399 = vmatmul.mubr.bf16.gmra.mxu0 %v324
        %v400 = vpop.f32.mrf.mxu0
        %v401 = vadd.f32 0.0, %v400
        %v402 = vpop.f32.mrf.mxu0
        %v403 = vpop.f32.mrf.mxu0
        %v404 = vadd.f32 0.0, %v403
        %v405 = vpop.f32.mrf.mxu0
        %406 = vmatprep.mubr.bf16.mxu0 0
        %407 = vmatmul.mubr.bf16.gmra.mxu0 %v327
        %v408 = vpop.f32.mrf.mxu0
        %v409 = vadd.f32 0.0, %v408
        %v410 = vpop.f32.mrf.mxu0
        %v411 = vpop.f32.mrf.mxu0
        %v412 = vadd.f32 0.0, %v411
        %v413 = vpop.f32.mrf.mxu0
        %414 = vmatprep.mubr.bf16.mxu0 0
        %415 = vmatmul.mubr.bf16.gmra.mxu0 %v330
        %v416 = vpop.f32.mrf.mxu0
        %v417 = vadd.f32 0.0, %v416
        %v418 = vpop.f32.mrf.mxu0
        %v419 = vpop.f32.mrf.mxu0
        %v420 = vadd.f32 0.0, %v419
        %v421 = vpop.f32.mrf.mxu0
        %422 = vmatprep.mubr.bf16.mxu0 0
        %423 = vmatmul.mubr.bf16.gmra.mxu0 %v333
        %v424 = vpop.f32.mrf.mxu0
        %v425 = vadd.f32 0.0, %v424
        %v426 = vpop.f32.mrf.mxu0
        %v427 = vpop.f32.mrf.mxu0
        %v428 = vadd.f32 0.0, %v427
        %v429 = vpop.f32.mrf.mxu0
        %430 = vmatprep.mubr.bf16.mxu0 0
        %431 = vmatmul.mubr.bf16.gmra.mxu0 %v336
        %v432 = vpop.f32.mrf.mxu0
        %v433 = vadd.f32 0.0, %v432
        %v434 = vpop.f32.mrf.mxu0
        %v435 = vpop.f32.mrf.mxu0
        %v436 = vadd.f32 0.0, %v435
        %v437 = vpop.f32.mrf.mxu0
        %438 = vdwg.mxu0
        %v439 = vld [vmem:[%s227] sm:$0xf]
        %v440 = vld [vmem:[%s227 + $0x4] sm:$0xf]
        %v441 = vld [vmem:[%s227 + $0x8] sm:$0xf]
        %v442 = vld [vmem:[%s227 + $0xc] sm:$0xf]
        %v443 = vld [vmem:[%s227 + $0x10] sm:$0xf]
        %v444 = vld [vmem:[%s227 + $0x14] sm:$0xf]
        %v445 = vld [vmem:[%s227 + $0x18] sm:$0xf]
        %v446 = vld [vmem:[%s227 + $0x1c] sm:$0xf]
        %v447 = vld [vmem:[%s227 + $0x20] sm:$0xf]
        %v448 = vld [vmem:[%s227 + $0x24] sm:$0xf]
        %v449 = vld [vmem:[%s227 + $0x28] sm:$0xf]
        %v450 = vld [vmem:[%s227 + $0x2c] sm:$0xf]
        %v451 = vld [vmem:[%s227 + $0x30] sm:$0xf]
        %v452 = vld [vmem:[%s227 + $0x34] sm:$0xf]
        %v453 = vld [vmem:[%s227 + $0x38] sm:$0xf]
        %v454 = vld [vmem:[%s227 + $0x3c] sm:$0xf]
        %v455 = vunpack.c.l.bf16 %v439
        %v456 = vunpack.c.l.bf16 %v440
        %v457 = vunpack.c.l.bf16 %v441
        %v458 = vunpack.c.l.bf16 %v442
        %v459 = vunpack.c.l.bf16 %v443
        %v460 = vunpack.c.l.bf16 %v444
        %v461 = vunpack.c.l.bf16 %v445
        %v462 = vunpack.c.l.bf16 %v446
        %v463 = vunpack.c.l.bf16 %v447
        %v464 = vunpack.c.l.bf16 %v448
        %v465 = vunpack.c.l.bf16 %v449
        %v466 = vunpack.c.l.bf16 %v450
        %v467 = vunpack.c.l.bf16 %v451
        %v468 = vunpack.c.l.bf16 %v452
        %v469 = vunpack.c.l.bf16 %v453
        %v470 = vunpack.c.l.bf16 %v454
        %v471 = vsub.f32 %v377, %v455
        %v472 = vsub.f32 %v380, %v456
        %v473 = vsub.f32 %v385, %v457
        %v474 = vsub.f32 %v388, %v458
        %v475 = vsub.f32 %v393, %v459
        %v476 = vsub.f32 %v396, %v460
        %v477 = vsub.f32 %v401, %v461
        %v478 = vsub.f32 %v404, %v462
        %v479 = vsub.f32 %v409, %v463
        %v480 = vsub.f32 %v412, %v464
        %v481 = vsub.f32 %v417, %v465
        %v482 = vsub.f32 %v420, %v466
        %v483 = vsub.f32 %v425, %v467
        %v484 = vsub.f32 %v428, %v468
        %v485 = vsub.f32 %v433, %v469
        %v486 = vsub.f32 %v436, %v470
        %v487 = vand.u32 2147483647, %v471
        %v488 = vand.u32 2147483647, %v472
        %v489 = vand.u32 2147483647, %v473
        %v490 = vand.u32 2147483647, %v474
        %v491 = vand.u32 2147483647, %v475
        %v492 = vand.u32 2147483647, %v476
        %v493 = vand.u32 2147483647, %v477
        %v494 = vand.u32 2147483647, %v478
        %v495 = vand.u32 2147483647, %v479
        %v496 = vand.u32 2147483647, %v480
        %v497 = vand.u32 2147483647, %v481
        %v498 = vand.u32 2147483647, %v482
        %v499 = vand.u32 2147483647, %v483
        %v500 = vand.u32 2147483647, %v484
        %v501 = vand.u32 2147483647, %v485
        %v502 = vand.u32 2147483647, %v486
        %p503 = scmp.ne.s32.totalorder %s17, 1
        // Predicated region
        $region33: #{tpu_custom_call.1} parent=31 // pred_check
          %p504 = pneg %p503
        $region34: #{tpu_custom_call.1} parent=31 // pred_check_branch
          %506 = sbr.rel (%p504) target = $region36
        $region35: #{tpu_custom_call.1} parent=31 // pred_region
          %vm507 = vcmask 523264
          %v508 = vsel %vm507, %v487, 0.0
          %v509 = vsel %vm507, %v488, 0.0
          %v510 = vadd.f32 %v508, %v509
          %v511 = vsel %vm507, %v489, 0.0
          %v512 = vadd.f32 %v510, %v511
          %v513 = vsel %vm507, %v490, 0.0
          %v514 = vadd.f32 %v512, %v513
          %v515 = vsel %vm507, %v491, 0.0
          %v516 = vadd.f32 %v514, %v515
          %v517 = vsel %vm507, %v492, 0.0
          %v518 = vadd.f32 %v516, %v517
          %v519 = vsel %vm507, %v493, 0.0
          %v520 = vadd.f32 %v518, %v519
          %v521 = vsel %vm507, %v494, 0.0
          %v522 = vadd.f32 %v520, %v521
          %v523 = vsel %vm507, %v495, 0.0
          %v524 = vadd.f32 %v522, %v523
          %v525 = vsel %vm507, %v496, 0.0
          %v526 = vadd.f32 %v524, %v525
          %v527 = vsel %vm507, %v497, 0.0
          %v528 = vadd.f32 %v526, %v527
          %v529 = vsel %vm507, %v498, 0.0
          %v530 = vadd.f32 %v528, %v529
          %v531 = vsel %vm507, %v499, 0.0
          %v532 = vadd.f32 %v530, %v531
          %v533 = vsel %vm507, %v500, 0.0
          %v534 = vadd.f32 %v532, %v533
          %v535 = vsel %vm507, %v501, 0.0
          %v536 = vadd.f32 %v534, %v535
          %v537 = vsel %vm507, %v502, 0.0
          %v538 = vadd.f32 %v536, %v537
          %539 = vadd.xlane.f32.xlu0 %v538
          %v540 = vpop.xlane.xlu0 %539
          %v541 = vrot.slane %v540, 4
          %v542 = vadd.f32 %v540, %v541
          %v543 = vrot.slane %v542, 2
          %v544 = vadd.f32 %v542, %v543
          %v545 = vrot.slane %v544, 1
          %v546 = vadd.f32 %v544, %v545
          %s547 = vtos %v546
          %v548 = vstv %s547
          %549 = vst [vmem:[%s204] sm:$0xff] %v548
        $region36: #{tpu_custom_call.1} parent=31 // pred_fallthru
          _
        %p550 = scmp.eq.s32.totalorder %s17, 1
        // Predicated region
        $region37: #{tpu_custom_call.1} parent=31 // pred_check
          %p551 = pneg %p550
        $region38: #{tpu_custom_call.1} parent=31 // pred_check_branch
          %553 = sbr.rel (%p551) target = $region40
        $region39: #{tpu_custom_call.1} parent=31 // pred_region
          %s554 = smul.u32 %s17, 128
          %v555 = vlaneseq
          %v556 = vshrl.u32 %v555, 7
          %v557 = vadd.s32 %v556, 8
          %v558 = vadd.s32 %v556, 16
          %v559 = vadd.s32 %v556, 24
          %v560 = vadd.s32 %v556, 32
          %v561 = vadd.s32 %v556, 40
          %v562 = vadd.s32 %v556, 48
          %v563 = vadd.s32 %v556, 56
          %v564 = vadd.s32 %v556, 64
          %v565 = vadd.s32 %v556, 72
          %v566 = vadd.s32 %v556, 80
          %v567 = vadd.s32 %v556, 88
          %v568 = vadd.s32 %v556, 96
          %v569 = vadd.s32 %v556, 104
          %v570 = vadd.s32 %v556, 112
          %v571 = vadd.s32 %v556, 120
          %v572 = vstv %s554
          %v573 = vadd.s32 %v572, %v556
          %v574 = vadd.s32 %v572, %v557
          %v575 = vadd.s32 %v572, %v558
          %v576 = vadd.s32 %v572, %v559
          %v577 = vadd.s32 %v572, %v560
          %v578 = vadd.s32 %v572, %v561
          %v579 = vadd.s32 %v572, %v562
          %v580 = vadd.s32 %v572, %v563
          %v581 = vadd.s32 %v572, %v564
          %v582 = vadd.s32 %v572, %v565
          %v583 = vadd.s32 %v572, %v566
          %v584 = vadd.s32 %v572, %v567
          %v585 = vadd.s32 %v572, %v568
          %v586 = vadd.s32 %v572, %v569
          %v587 = vadd.s32 %v572, %v570
          %v588 = vadd.s32 %v572, %v571
          %vm589 = vcmp.lt.s32.totalorder %v573, 200
          %vm590 = vcmp.lt.s32.totalorder %v574, 200
          %vm591 = vcmp.lt.s32.totalorder %v575, 200
          %vm592 = vcmp.lt.s32.totalorder %v576, 200
          %vm593 = vcmp.lt.s32.totalorder %v577, 200
          %vm594 = vcmp.lt.s32.totalorder %v578, 200
          %vm595 = vcmp.lt.s32.totalorder %v579, 200
          %vm596 = vcmp.lt.s32.totalorder %v580, 200
          %vm597 = vcmp.lt.s32.totalorder %v581, 200
          %vm598 = vcmp.lt.s32.totalorder %v582, 200
          %vm599 = vcmp.lt.s32.totalorder %v583, 200
          %vm600 = vcmp.lt.s32.totalorder %v584, 200
          %vm601 = vcmp.lt.s32.totalorder %v585, 200
          %vm602 = vcmp.lt.s32.totalorder %v586, 200
          %vm603 = vcmp.lt.s32.totalorder %v587, 200
          %vm604 = vcmp.lt.s32.totalorder %v588, 200
          %v605 = vsel %vm589, 1, 0
          %v606 = vsel %vm590, 1, 0
          %v607 = vsel %vm591, 1, 0
          %v608 = vsel %vm592, 1, 0
          %v609 = vsel %vm593, 1, 0
          %v610 = vsel %vm594, 1, 0
          %v611 = vsel %vm595, 1, 0
          %v612 = vsel %vm596, 1, 0
          %v613 = vsel %vm597, 1, 0
          %v614 = vsel %vm598, 1, 0
          %v615 = vsel %vm599, 1, 0
          %v616 = vsel %vm600, 1, 0
          %v617 = vsel %vm601, 1, 0
          %v618 = vsel %vm602, 1, 0
          %v619 = vsel %vm603, 1, 0
          %v620 = vsel %vm604, 1, 0
          %vm621 = vcmp.eq.s32.totalorder %v605, 1
          %vm622 = vcmp.eq.s32.totalorder %v606, 1
          %vm623 = vcmp.eq.s32.totalorder %v607, 1
          %vm624 = vcmp.eq.s32.totalorder %v608, 1
          %vm625 = vcmp.eq.s32.totalorder %v609, 1
          %vm626 = vcmp.eq.s32.totalorder %v610, 1
          %vm627 = vcmp.eq.s32.totalorder %v611, 1
          %vm628 = vcmp.eq.s32.totalorder %v612, 1
          %vm629 = vcmp.eq.s32.totalorder %v613, 1
          %vm630 = vcmp.eq.s32.totalorder %v614, 1
          %vm631 = vcmp.eq.s32.totalorder %v615, 1
          %vm632 = vcmp.eq.s32.totalorder %v616, 1
          %vm633 = vcmp.eq.s32.totalorder %v617, 1
          %vm634 = vcmp.eq.s32.totalorder %v618, 1
          %vm635 = vcmp.eq.s32.totalorder %v619, 1
          %vm636 = vcmp.eq.s32.totalorder %v620, 1
          %v637 = vsel %vm621, %v487, 0.0
          %v638 = vsel %vm622, %v488, 0.0
          %v639 = vsel %vm623, %v489, 0.0
          %v640 = vsel %vm624, %v490, 0.0
          %v641 = vsel %vm625, %v491, 0.0
          %v642 = vsel %vm626, %v492, 0.0
          %v643 = vsel %vm627, %v493, 0.0
          %v644 = vsel %vm628, %v494, 0.0
          %v645 = vsel %vm629, %v495, 0.0
          %v646 = vsel %vm630, %v496, 0.0
          %v647 = vsel %vm631, %v497, 0.0
          %v648 = vsel %vm632, %v498, 0.0
          %v649 = vsel %vm633, %v499, 0.0
          %v650 = vsel %vm634, %v500, 0.0
          %v651 = vsel %vm635, %v501, 0.0
          %v652 = vsel %vm636, %v502, 0.0
          %vm653 = vcmask 523264
          %v654 = vsel %vm653, %v637, 0.0
          %v655 = vsel %vm653, %v638, 0.0
          %v656 = vadd.f32 %v654, %v655
          %v657 = vsel %vm653, %v639, 0.0
          %v658 = vadd.f32 %v656, %v657
          %v659 = vsel %vm653, %v640, 0.0
          %v660 = vadd.f32 %v658, %v659
          %v661 = vsel %vm653, %v641, 0.0
          %v662 = vadd.f32 %v660, %v661
          %v663 = vsel %vm653, %v642, 0.0
          %v664 = vadd.f32 %v662, %v663
          %v665 = vsel %vm653, %v643, 0.0
          %v666 = vadd.f32 %v664, %v665
          %v667 = vsel %vm653, %v644, 0.0
          %v668 = vadd.f32 %v666, %v667
          %v669 = vsel %vm653, %v645, 0.0
          %v670 = vadd.f32 %v668, %v669
          %v671 = vsel %vm653, %v646, 0.0
          %v672 = vadd.f32 %v670, %v671
          %v673 = vsel %vm653, %v647, 0.0
          %v674 = vadd.f32 %v672, %v673
          %v675 = vsel %vm653, %v648, 0.0
          %v676 = vadd.f32 %v674, %v675
          %v677 = vsel %vm653, %v649, 0.0
          %v678 = vadd.f32 %v676, %v677
          %v679 = vsel %vm653, %v650, 0.0
          %v680 = vadd.f32 %v678, %v679
          %v681 = vsel %vm653, %v651, 0.0
          %v682 = vadd.f32 %v680, %v681
          %v683 = vsel %vm653, %v652, 0.0
          %v684 = vadd.f32 %v682, %v683
          %685 = vadd.xlane.f32.xlu0 %v684
          %v686 = vpop.xlane.xlu0 %685
          %v687 = vrot.slane %v686, 4
          %v688 = vadd.f32 %v686, %v687
          %v689 = vrot.slane %v688, 2
          %v690 = vadd.f32 %v688, %v689
          %v691 = vrot.slane %v690, 1
          %v692 = vadd.f32 %v690, %v691
          %s693 = vtos %v692
          %v694 = vstv %s693
          %695 = vst [vmem:[%s204] sm:$0xff] %v694
        $region40: #{tpu_custom_call.1} parent=31 // pred_fallthru
          _
        %s696 = sand.u32 %s98, 1
        %s697 = scalar_lea.sflag [#allocation3], %s696
        %s698 = sand.u32 %s98, 1
        %s699 = smul.addr %s698, 8
        %s700 = scalar_lea.vmem [#allocation2], %s699
        // Predicated region
        $region41: #{tpu_custom_call.1} parent=31 // pred_check
          %p701 = pneg %p108
        $region42: #{tpu_custom_call.1} parent=31 // pred_check_branch
          %703 = sbr.rel (%p701) target = $region44
        $region43: #{tpu_custom_call.1} parent=31 // pred_region
          %s705 = ssub.s32 128, 128
          %706 = vsyncadd %s697, %s705
          %s707 = smul.addr %s17, 128
          %s708 = scalar_lea.hbm %s3, %s707
          %s710 = sshll.u32 %s700, 4
          %s711 = int_to_ptr.vmem [resolvable:$true] %s710
          %713 = dma.vmem_to_hbm [thread:$0]  %s711, 128, %s708, %s697
        $region44: #{tpu_custom_call.1} parent=31 // pred_fallthru
          _
      $region32: #{tpu_custom_call.1} parent=5 // pred_fallthru
        _
      %p714 = scmp.le.s32.totalorder 2, %s12
      // Predicated region
      $region45: #{tpu_custom_call.1} parent=5 // pred_check
        %p715 = pneg %p714
      $region46: #{tpu_custom_call.1} parent=5 // pred_check_branch
        %717 = sbr.rel (%p715) target = $region48
      $region47: #{tpu_custom_call.1} parent=5 // pred_region
        %s718 = ssub.s32 %s12, 2
        // Predicated region
        $region49: #{tpu_custom_call.1} parent=47 // pred_check
          %p719 = pneg %p114
        $region50: #{tpu_custom_call.1} parent=47 // pred_check_branch
          %721 = sbr.rel (%p719) target = $region52
        $region51: #{tpu_custom_call.1} parent=47 // pred_region
          %s722 = sand.u32 %s99, 1
          %s723 = scalar_lea.sflag [#allocation3], %s722
          %s724 = sand.u32 %s99, 1
          %s725 = smul.addr %s724, 8
          %s726 = scalar_lea.vmem [#allocation2], %s725
          %727 = dma.done %s723, 128
        $region52: #{tpu_custom_call.1} parent=47 // pred_fallthru
          _
      $region48: #{tpu_custom_call.1} parent=5 // pred_fallthru
        _
    $region6: #{tpu_custom_call.1} parent=1 // loop_footer
      %s16 = sadd.s32 1, %s12
    $region7: #{tpu_custom_call.1} parent=1 // loop_footer_branch
      %11 = sbr.rel target = $region3
    $region8: #{tpu_custom_call.1} parent=1 // loop_exit
      _
    %728 = vsyncpa [#allocation3], 1
    %s729 = scalar_lea.sflag [#allocation3], 1
    %730 = vsyncpa %s729, 1

</llo_original>
